<compile_context>
chip_gen: v6e
topology: v6e:2x2x1
jax: 0.10.0
libtpu: 0.0.40
codegen_flags: <defaults>
</compile_context>

<pallas_src>
import functools

import jax
import jax.numpy as jnp
from jax.experimental import pallas as pl
from jax.experimental.pallas import tpu as pltpu

# Layer widths of NeuralNetwork5 (excluding the input width, which is N_features).
HIDDEN_SIZES = (32, 16, 8, 4, 2, 1)
NUM_LAYERS = len(HIDDEN_SIZES)          # 6
N_HIDDEN_STACK = NUM_LAYERS - 2         # layers 1..4 run as padded 128x128 MXU matmuls

LANE = 128
SUBLANE = 8
MXU_DTYPE = jnp.bfloat16                # MXU operand dtype (f32 accumulation everywhere)

MAX_RESIDENT_FEATURES = 2048            # above this, stream x/w0 over a K grid axis
MAX_BLOCK_BATCH = 8192                  # upper clamp on the batch tile
VMEM_BUDGET_BYTES = 24 << 20            # tile budget, safe on v5e/v6e (128 MiB) and v7x (64 MiB)
MAX_VMEM_LIMIT_BYTES = 48 << 20         # never ask for more scoped VMEM than this


def _round_up(x, m):
    return ((x + m - 1) // m) * m


def _round_down(x, m):
    return (x // m) * m


# --------------------------------------------------------------------------- kernel


def _mlp_kernel(x_ref, w0_ref, b0_ref, wh_ref, bh_ref, w5_ref, b5_ref,
                o_ref, acc_ref):
    """Fused 6-layer MLP on one (batch tile, feature slice) grid step.

    x_ref  : (TB, TK)        native dtype (usually f32) input slice
    w0_ref : (TK, 128)       bf16  layer-0 weight slice, (in, out) order
    b0_ref : (1, 128)        f32   layer-0 bias
    wh_ref : (4, 128, 128)   bf16  layers 1..4 weights (zero padded)
    bh_ref : (4, 1, 128)     f32   layers 1..4 biases (zero padded)
    w5_ref : (1, 128)        f32   layer-5 (2 -> 1) weight row (zero padded)
    b5_ref : (1, 1)          f32   layer-5 bias
    o_ref  : (TB, 1)         f32   final logits
    acc_ref: (TB, 128)       f32   layer-0 accumulator (persists over the K axis)
    """
    k = pl.program_id(1)

    @pl.when(k == 0)
    def _():
        acc_ref[...] = jnp.zeros_like(acc_ref)

    # Layer 0 partial product for this feature slice (in-kernel bf16 cast, f32 acc).
    acc_ref[...] += jnp.dot(x_ref[...].astype(MXU_DTYPE), w0_ref[...],
                            preferred_element_type=jnp.float32)

    @pl.when(k == pl.num_programs(1) - 1)
    def _():
        h = jnp.maximum(acc_ref[...] + b0_ref[...], 0.0)

        # Layers 1..4: padded (TB,128)x(128,128) MXU matmuls; zero padding is exact.
        for layer in range(N_HIDDEN_STACK):
            h = jnp.dot(h.astype(MXU_DTYPE), wh_ref[layer],
                        preferred_element_type=jnp.float32)
            h = jnp.maximum(h + bh_ref[layer], 0.0)

        # Layer 5 (2 -> 1): VPU multiply + lane reduction instead of a 5th MXU matmul.
        logits = jnp.sum(h * w5_ref[...], axis=-1, keepdims=True) + b5_ref[...]
        o_ref[...] = logits


# ------------------------------------------------------------------ tiling / planning


def _plan(batch, n_features, x_itemsize, block_batch):
    """Pick (tb, tk, nk, vmem_limit) against an explicit, portable VMEM budget."""
    mxu_bytes = jnp.dtype(MXU_DTYPE).itemsize

    # Feature (K) blocking: only split when wide and cleanly divisible by 128;
    # otherwise a single full-width block (legal: block dim == full array dim).
    tk = n_features
    if n_features > MAX_RESIDENT_FEATURES:
        for cand in (2048, 1024, 512, 256, 128):
            if n_features % cand == 0:
                tk = cand
                break
    nk = n_features // tk

    # Double-buffered parameter footprint (default Pallas pipelining = 2 buffers).
    param_bytes = (2 * tk * LANE * mxu_bytes
                   + 2 * N_HIDDEN_STACK * LANE * LANE * mxu_bytes
                   + 64 * 1024)                       # small padded bias / w5 / b5 tiles
    per_row = (2 * tk * x_itemsize                    # double-buffered x tile (native dtype)
               + LANE * 4                             # layer-0 f32 accumulator scratch
               + 6 * LANE * 4                         # live f32/bf16 intermediates (headroom)
               + 2 * 4)                               # double-buffered (tb, 1) output

    avail = max(VMEM_BUDGET_BYTES - param_bytes - (1 << 20), SUBLANE * per_row)
    tb = min(avail // per_row, MAX_BLOCK_BATCH, _round_up(batch, SUBLANE))
    if block_batch is not None:
        tb = min(tb, block_batch)
    tb = max(_round_down(tb, SUBLANE), SUBLANE)

    est_bytes = param_bytes + tb * per_row
    vmem_limit = int(min(MAX_VMEM_LIMIT_BYTES,
                         max(16 << 20, est_bytes * 3 // 2 + (2 << 20))))
    return tb, tk, nk, vmem_limit


def _batch_dimension_semantics():
    """v7x has 2 TensorCores/chip: CORE_PARALLEL shards the batch grid across both
    cores (plain "parallel" is a near no-op there).  PARALLEL on v5e/v6e."""
    try:
        kind = jax.devices()[0].device_kind.lower()
    except Exception:
        kind = ""
    if "v7" in kind or "tpu7" in kind:
        return pltpu.CORE_PARALLEL
    return pltpu.PARALLEL


# ----------------------------------------------------------------------- forward pass


@functools.partial(jax.jit, static_argnames=("block_batch",))
def neural_network5_forward(x, w0, b0, wh, bh, w5, b5, *, block_batch=None):
    """x: (B, ...) with prod(...) == N_features.  Returns (B, 1) f32 logits.

    `block_batch` is an optional static cap on the batch tile (auto-sized otherwise).
    """
    batch = x.shape[0]
    n_features = w0.shape[0]

    # nn.Flatten only -- no cast, no pad, no extra HBM pass (kernel casts in VMEM).
    x2d = x.reshape(batch, -1)
    if x2d.shape[1] != n_features:
        raise ValueError(
            f"flattened feature width {x2d.shape[1]} != weight fan-in {n_features}")

    tb, tk, nk, vmem_limit = _plan(batch, n_features, x2d.dtype.itemsize, block_batch)
    grid = (pl.cdiv(batch, tb), nk)

    # Note: a partial last batch tile reads past the array; rows are independent and
    # the (tb, 1) writeback is masked, so this is correct (no cross-row reductions).
    return pl.pallas_call(
        _mlp_kernel,
        out_shape=jax.ShapeDtypeStruct((batch, 1), jnp.float32),
        grid_spec=pltpu.PrefetchScalarGridSpec(
            num_scalar_prefetch=0,
            grid=grid,
            in_specs=[
                pl.BlockSpec((tb, tk), lambda i, k: (i, k)),              # x (native dtype)
                pl.BlockSpec((tk, LANE), lambda i, k: (k, 0)),            # w0 slice
                pl.BlockSpec((1, LANE), lambda i, k: (0, 0)),             # b0 (resident)
                pl.BlockSpec((N_HIDDEN_STACK, LANE, LANE),
                             lambda i, k: (0, 0, 0)),                     # wh (resident)
                pl.BlockSpec((N_HIDDEN_STACK, 1, LANE),
                             lambda i, k: (0, 0, 0)),                     # bh (resident)
                pl.BlockSpec((1, LANE), lambda i, k: (0, 0)),             # w5 row (resident)
                pl.BlockSpec((1, 1), lambda i, k: (0, 0)),                # b5 (resident)
            ],
            out_specs=pl.BlockSpec((tb, 1), lambda i, k: (i, 0)),         # logits tile
            scratch_shapes=[pltpu.VMEM((tb, LANE), jnp.float32)],         # layer-0 acc
        ),
        compiler_params=pltpu.CompilerParams(
            dimension_semantics=(_batch_dimension_semantics(), pltpu.ARBITRARY),
            vmem_limit_bytes=vmem_limit,
        ),
    )(x2d, w0, b0, wh, bh, w5, b5)


# -------------------------------------------------------------------- params / reference


def prepare_params(weights, biases, *, torch_layout=False):
    """One-time padding/stacking of parameters (hoisted out of the forward).

    weights[l]: (fan_in, fan_out) float, (in, out) layout.  Set torch_layout=True
    when passing PyTorch nn.Linear weights, which are (out, in) -- they will be
    transposed here.  biases[l]: (fan_out,) float.
    """
    if torch_layout:
        weights = [jnp.asarray(w).T for w in weights]

    n_features = weights[0].shape[0]

    w0 = jnp.zeros((n_features, LANE), MXU_DTYPE)
    w0 = w0.at[:, :HIDDEN_SIZES[0]].set(jnp.asarray(weights[0], MXU_DTYPE))
    b0 = jnp.zeros((1, LANE), jnp.float32)
    b0 = b0.at[0, :HIDDEN_SIZES[0]].set(jnp.asarray(biases[0], jnp.float32))

    wh = jnp.zeros((N_HIDDEN_STACK, LANE, LANE), MXU_DTYPE)
    bh = jnp.zeros((N_HIDDEN_STACK, 1, LANE), jnp.float32)
    for l in range(N_HIDDEN_STACK):
        fin, fout = HIDDEN_SIZES[l], HIDDEN_SIZES[l + 1]
        wh = wh.at[l, :fin, :fout].set(jnp.asarray(weights[l + 1], MXU_DTYPE))
        bh = bh.at[l, 0, :fout].set(jnp.asarray(biases[l + 1], jnp.float32))

    # Final 2 -> 1 layer kept in f32 as a lane row (VPU multiply + lane reduction).
    w5 = jnp.zeros((1, LANE), jnp.float32)
    w5 = w5.at[0, :HIDDEN_SIZES[-2]].set(jnp.asarray(weights[-1], jnp.float32)[:, 0])
    b5 = jnp.asarray(biases[-1], jnp.float32).reshape(1, 1)
    return w0, b0, wh, bh, w5, b5


def init_params(key, n_features):
    """Deterministic init mimicking torch.nn.Linear default U(-1/sqrt(fan_in), +)."""
    in_sizes = (n_features,) + HIDDEN_SIZES[:-1]
    weights, biases = [], []
    for fin, fout in zip(in_sizes, HIDDEN_SIZES):
        key, kw, kb = jax.random.split(key, 3)
        bound = 1.0 / (fin ** 0.5)
        # stored as (in, out): forward is x @ W + b  (transpose of PyTorch's (out, in))
        weights.append(jax.random.uniform(kw, (fin, fout), jnp.float32, -bound, bound))
        biases.append(jax.random.uniform(kb, (fout,), jnp.float32, -bound, bound))
    return weights, biases


def reference_forward(x, weights, biases):
    """Pure-JAX reference mirroring the kernel's numerics (MXU_DTYPE operands,
    f32 accumulation, f32 final 2->1 layer)."""
    h = x.reshape(x.shape[0], -1).astype(jnp.float32)
    for l in range(NUM_LAYERS - 1):
        h = jnp.dot(h.astype(MXU_DTYPE), weights[l].astype(MXU_DTYPE),
                    preferred_element_type=jnp.float32) + biases[l]
        h = jnp.maximum(h, 0.0)
    h = jnp.dot(h, weights[-1].astype(jnp.float32),
                preferred_element_type=jnp.float32,
                precision=jax.lax.Precision.HIGHEST) + biases[-1]
    return h


# ------------------------------------------------------------------------------- main


if __name__ == "__main__":
    key = jax.random.PRNGKey(0)
    kx, kp = jax.random.split(key)

    # Small example: batch=8, input (8, 4, 4) -> nn.Flatten -> N_features = 16.
    x = jax.random.normal(kx, (8, 4, 4), jnp.float32)
    n_features = 4 * 4

    weights, biases = init_params(kp, n_features)
    params = prepare_params(weights, biases)          # one-time padding/stacking

    out = neural_network5_forward(x, *params)
    out = jax.block_until_ready(out)

    ref = reference_forward(x, weights, biases)
    assert out.shape == (8, 1), out.shape
    assert jnp.allclose(out, ref, atol=2e-3, rtol=2e-3), (out, ref)

    print("KERNEL_OK")
</pallas_src>

<mosaic_0001>
module attributes {stable_mosaic.version = 11 : i64} {
  func.func @_mlp_kernel(%arg0: i32, %arg1: i32, %arg2: memref<8x16xf32, #tpu.memory_space<vmem>>, %arg3: memref<16x128xbf16, #tpu.memory_space<vmem>>, %arg4: memref<1x128xf32, #tpu.memory_space<vmem>>, %arg5: memref<4x128x128xbf16, #tpu.memory_space<vmem>>, %arg6: memref<4x1x128xf32, #tpu.memory_space<vmem>>, %arg7: memref<1x128xf32, #tpu.memory_space<vmem>>, %arg8: memref<1x1xf32, #tpu.memory_space<vmem>>, %arg9: memref<8x1xf32, #tpu.memory_space<vmem>>, %arg10: memref<8x128xf32, #tpu.memory_space<vmem>>) attributes {dimension_semantics = [#tpu.dimension_semantics<parallel>, #tpu.dimension_semantics<arbitrary>], iteration_bounds = array<i64: 1, 1>, scalar_prefetch = 0 : i64, scratch_operands = 1 : i64, tpu.core_type = #tpu.core_type<tc>, window_params = [{transform_indices = @transform_0, window_bounds = array<i64: 8, 16>}, {transform_indices = @transform_1, window_bounds = array<i64: 16, 128>}, {pipeline_mode = #tpu.pipeline_mode<synchronous>, transform_indices = @transform_2, window_bounds = array<i64: 1, 128>}, {pipeline_mode = #tpu.pipeline_mode<synchronous>, transform_indices = @transform_3, window_bounds = array<i64: 4, 128, 128>}, {pipeline_mode = #tpu.pipeline_mode<synchronous>, transform_indices = @transform_4, window_bounds = array<i64: 4, 1, 128>}, {pipeline_mode = #tpu.pipeline_mode<synchronous>, transform_indices = @transform_5, window_bounds = array<i64: 1, 128>}, {pipeline_mode = #tpu.pipeline_mode<synchronous>, transform_indices = @transform_6, window_bounds = array<i64: 1, 1>}, {transform_indices = @transform_7, window_bounds = array<i64: 8, 1>}]} {
    %c0_i32 = arith.constant 0 : i32
    %0 = arith.cmpi eq, %arg1, %c0_i32 : i32
    %1 = arith.extui %0 : i1 to i32
    %c0_i32_0 = arith.constant 0 : i32
    %2 = arith.cmpi ne, %1, %c0_i32_0 : i32
    scf.if %2 {
      %cst_10 = arith.constant 0.000000e+00 : f32
      %13 = vector.broadcast %cst_10 : f32 to vector<8x128xf32>
      %c0_11 = arith.constant 0 : index
      %c0_12 = arith.constant 0 : index
      %14 = vector.load %arg10[%c0_11, %c0_12] : memref<8x128xf32, #tpu.memory_space<vmem>>, vector<8x128xf32>
      tpu.vector_store %arg10[%c0_11, %c0_12], %13 {strides = array<i32>} : memref<8x128xf32, #tpu.memory_space<vmem>>, vector<8x128xf32>,
    } else {
    }
    %c0 = arith.constant 0 : index
    %c0_1 = arith.constant 0 : index
    %3 = vector.load %arg10[%c0, %c0_1] : memref<8x128xf32, #tpu.memory_space<vmem>>, vector<8x128xf32>
    %c0_2 = arith.constant 0 : index
    %c0_3 = arith.constant 0 : index
    %4 = vector.load %arg2[%c0_2, %c0_3] : memref<8x16xf32, #tpu.memory_space<vmem>>, vector<8x16xf32>
    %5 = arith.truncf %4 : vector<8x16xf32> to vector<8x16xbf16>
    %c0_4 = arith.constant 0 : index
    %c0_5 = arith.constant 0 : index
    %6 = vector.load %arg3[%c0_4, %c0_5] : memref<16x128xbf16, #tpu.memory_space<vmem>>, vector<16x128xbf16>
    %cst = arith.constant dense<0.000000e+00> : vector<8x128xf32>
    %7 = tpu.matmul %5, %6, %cst {dimension_numbers = #tpu.dot_dimension_numbers<[1], [0], [0], [1], [0, 0, 1, 1], [], []>} : vector<8x16xbf16>, vector<16x128xbf16>, vector<8x128xf32> -> vector<8x128xf32>
    %8 = arith.addf %3, %7 : vector<8x128xf32>
    %c0_6 = arith.constant 0 : index
    %c0_7 = arith.constant 0 : index
    %9 = vector.load %arg10[%c0_6, %c0_7] : memref<8x128xf32, #tpu.memory_space<vmem>>, vector<8x128xf32>
    tpu.vector_store %arg10[%c0_6, %c0_7], %8 {strides = array<i32>} : memref<8x128xf32, #tpu.memory_space<vmem>>, vector<8x128xf32>,
    %c0_i32_8 = arith.constant 0 : i32
    %10 = arith.cmpi eq, %arg1, %c0_i32_8 : i32
    %11 = arith.extui %10 : i1 to i32
    %c0_i32_9 = arith.constant 0 : i32
    %12 = arith.cmpi ne, %11, %c0_i32_9 : i32
    scf.if %12 {
      %c0_10 = arith.constant 0 : index
      %c0_11 = arith.constant 0 : index
      %13 = vector.load %arg10[%c0_10, %c0_11] : memref<8x128xf32, #tpu.memory_space<vmem>>, vector<8x128xf32>
      %c0_12 = arith.constant 0 : index
      %c0_13 = arith.constant 0 : index
      %14 = vector.load %arg4[%c0_12, %c0_13] : memref<1x128xf32, #tpu.memory_space<vmem>>, vector<1x128xf32>
      %15 = vector.broadcast %14 : vector<1x128xf32> to vector<8x128xf32>
      %16 = arith.addf %13, %15 : vector<8x128xf32>
      %cst_14 = arith.constant 0.000000e+00 : f32
      %17 = vector.broadcast %cst_14 : f32 to vector<8x128xf32>
      %18 = arith.maximumf %16, %17 : vector<8x128xf32>
      %19 = arith.truncf %18 : vector<8x128xf32> to vector<8x128xbf16>
      %c0_15 = arith.constant 0 : index
      %c0_16 = arith.constant 0 : index
      %c0_17 = arith.constant 0 : index
      %20 = vector.load %arg5[%c0_15, %c0_16, %c0_17] : memref<4x128x128xbf16, #tpu.memory_space<vmem>>, vector<1x128x128xbf16>
      %21 = vector.shape_cast %20 : vector<1x128x128xbf16> to vector<128x128xbf16>
      %cst_18 = arith.constant dense<0.000000e+00> : vector<8x128xf32>
      %22 = tpu.matmul %19, %21, %cst_18 {dimension_numbers = #tpu.dot_dimension_numbers<[1], [0], [0], [1], [0, 0, 1, 1], [], []>} : vector<8x128xbf16>, vector<128x128xbf16>, vector<8x128xf32> -> vector<8x128xf32>
      %c0_19 = arith.constant 0 : index
      %c0_20 = arith.constant 0 : index
      %c0_21 = arith.constant 0 : index
      %23 = vector.load %arg6[%c0_19, %c0_20, %c0_21] : memref<4x1x128xf32, #tpu.memory_space<vmem>>, vector<1x1x128xf32>
      %24 = vector.shape_cast %23 : vector<1x1x128xf32> to vector<1x128xf32>
      %25 = vector.broadcast %24 : vector<1x128xf32> to vector<8x128xf32>
      %26 = arith.addf %22, %25 : vector<8x128xf32>
      %cst_22 = arith.constant 0.000000e+00 : f32
      %27 = vector.broadcast %cst_22 : f32 to vector<8x128xf32>
      %28 = arith.maximumf %26, %27 : vector<8x128xf32>
      %29 = arith.truncf %28 : vector<8x128xf32> to vector<8x128xbf16>
      %c1 = arith.constant 1 : index
      %c0_23 = arith.constant 0 : index
      %c0_24 = arith.constant 0 : index
      %30 = vector.load %arg5[%c1, %c0_23, %c0_24] : memref<4x128x128xbf16, #tpu.memory_space<vmem>>, vector<1x128x128xbf16>
      %31 = vector.shape_cast %30 : vector<1x128x128xbf16> to vector<128x128xbf16>
      %cst_25 = arith.constant dense<0.000000e+00> : vector<8x128xf32>
      %32 = tpu.matmul %29, %31, %cst_25 {dimension_numbers = #tpu.dot_dimension_numbers<[1], [0], [0], [1], [0, 0, 1, 1], [], []>} : vector<8x128xbf16>, vector<128x128xbf16>, vector<8x128xf32> -> vector<8x128xf32>
      %c1_26 = arith.constant 1 : index
      %c0_27 = arith.constant 0 : index
      %c0_28 = arith.constant 0 : index
      %33 = vector.load %arg6[%c1_26, %c0_27, %c0_28] : memref<4x1x128xf32, #tpu.memory_space<vmem>>, vector<1x1x128xf32>
      %34 = vector.shape_cast %33 : vector<1x1x128xf32> to vector<1x128xf32>
      %35 = vector.broadcast %34 : vector<1x128xf32> to vector<8x128xf32>
      %36 = arith.addf %32, %35 : vector<8x128xf32>
      %cst_29 = arith.constant 0.000000e+00 : f32
      %37 = vector.broadcast %cst_29 : f32 to vector<8x128xf32>
      %38 = arith.maximumf %36, %37 : vector<8x128xf32>
      %39 = arith.truncf %38 : vector<8x128xf32> to vector<8x128xbf16>
      %c2 = arith.constant 2 : index
      %c0_30 = arith.constant 0 : index
      %c0_31 = arith.constant 0 : index
      %40 = vector.load %arg5[%c2, %c0_30, %c0_31] : memref<4x128x128xbf16, #tpu.memory_space<vmem>>, vector<1x128x128xbf16>
      %41 = vector.shape_cast %40 : vector<1x128x128xbf16> to vector<128x128xbf16>
      %cst_32 = arith.constant dense<0.000000e+00> : vector<8x128xf32>
      %42 = tpu.matmul %39, %41, %cst_32 {dimension_numbers = #tpu.dot_dimension_numbers<[1], [0], [0], [1], [0, 0, 1, 1], [], []>} : vector<8x128xbf16>, vector<128x128xbf16>, vector<8x128xf32> -> vector<8x128xf32>
      %c2_33 = arith.constant 2 : index
      %c0_34 = arith.constant 0 : index
      %c0_35 = arith.constant 0 : index
      %43 = vector.load %arg6[%c2_33, %c0_34, %c0_35] : memref<4x1x128xf32, #tpu.memory_space<vmem>>, vector<1x1x128xf32>
      %44 = vector.shape_cast %43 : vector<1x1x128xf32> to vector<1x128xf32>
      %45 = vector.broadcast %44 : vector<1x128xf32> to vector<8x128xf32>
      %46 = arith.addf %42, %45 : vector<8x128xf32>
      %cst_36 = arith.constant 0.000000e+00 : f32
      %47 = vector.broadcast %cst_36 : f32 to vector<8x128xf32>
      %48 = arith.maximumf %46, %47 : vector<8x128xf32>
      %49 = arith.truncf %48 : vector<8x128xf32> to vector<8x128xbf16>
      %c3 = arith.constant 3 : index
      %c0_37 = arith.constant 0 : index
      %c0_38 = arith.constant 0 : index
      %50 = vector.load %arg5[%c3, %c0_37, %c0_38] : memref<4x128x128xbf16, #tpu.memory_space<vmem>>, vector<1x128x128xbf16>
      %51 = vector.shape_cast %50 : vector<1x128x128xbf16> to vector<128x128xbf16>
      %cst_39 = arith.constant dense<0.000000e+00> : vector<8x128xf32>
      %52 = tpu.matmul %49, %51, %cst_39 {dimension_numbers = #tpu.dot_dimension_numbers<[1], [0], [0], [1], [0, 0, 1, 1], [], []>} : vector<8x128xbf16>, vector<128x128xbf16>, vector<8x128xf32> -> vector<8x128xf32>
      %c3_40 = arith.constant 3 : index
      %c0_41 = arith.constant 0 : index
      %c0_42 = arith.constant 0 : index
      %53 = vector.load %arg6[%c3_40, %c0_41, %c0_42] : memref<4x1x128xf32, #tpu.memory_space<vmem>>, vector<1x1x128xf32>
      %54 = vector.shape_cast %53 : vector<1x1x128xf32> to vector<1x128xf32>
      %55 = vector.broadcast %54 : vector<1x128xf32> to vector<8x128xf32>
      %56 = arith.addf %52, %55 : vector<8x128xf32>
      %cst_43 = arith.constant 0.000000e+00 : f32
      %57 = vector.broadcast %cst_43 : f32 to vector<8x128xf32>
      %58 = arith.maximumf %56, %57 : vector<8x128xf32>
      %c0_44 = arith.constant 0 : index
      %c0_45 = arith.constant 0 : index
      %59 = vector.load %arg7[%c0_44, %c0_45] : memref<1x128xf32, #tpu.memory_space<vmem>>, vector<1x128xf32>
      %60 = vector.broadcast %59 : vector<1x128xf32> to vector<8x128xf32>
      %61 = arith.mulf %58, %60 : vector<8x128xf32>
      %cst_46 = arith.constant dense<0.000000e+00> : vector<8xf32>
      %62 = vector.multi_reduction <add>, %61, %cst_46 [1] : vector<8x128xf32> to vector<8xf32>
      %63 = vector.shape_cast %62 : vector<8xf32> to vector<8x1xf32>
      %c0_47 = arith.constant 0 : index
      %c0_48 = arith.constant 0 : index
      %64 = vector.load %arg8[%c0_47, %c0_48] : memref<1x1xf32, #tpu.memory_space<vmem>>, vector<1x1xf32>
      %65 = vector.broadcast %64 : vector<1x1xf32> to vector<8x1xf32>
      %66 = arith.addf %63, %65 : vector<8x1xf32>
      %c0_49 = arith.constant 0 : index
      %c0_50 = arith.constant 0 : index
      %67 = vector.load %arg9[%c0_49, %c0_50] : memref<8x1xf32, #tpu.memory_space<vmem>>, vector<8x1xf32>
      tpu.vector_store %arg9[%c0_49, %c0_50], %66 {strides = array<i32>} : memref<8x1xf32, #tpu.memory_space<vmem>>, vector<8x1xf32>,
    } else {
    }
    return
  }
  func.func @transform_0(%arg0: i32, %arg1: i32) -> (i32, i32) {
    %c0_i32 = arith.constant 0 : i32
    return %arg0, %arg1 : i32, i32
  }
  func.func @transform_1(%arg0: i32, %arg1: i32) -> (i32, i32) {
    %c0_i32 = arith.constant 0 : i32
    %c0_i32_0 = arith.constant 0 : i32
    return %arg1, %c0_i32 : i32, i32
  }
  func.func @transform_2(%arg0: i32, %arg1: i32) -> (i32, i32) {
    %c0_i32 = arith.constant 0 : i32
    %c0_i32_0 = arith.constant 0 : i32
    %c0_i32_1 = arith.constant 0 : i32
    return %c0_i32, %c0_i32_0 : i32, i32
  }
  func.func @transform_3(%arg0: i32, %arg1: i32) -> (i32, i32, i32) {
    %c0_i32 = arith.constant 0 : i32
    %c0_i32_0 = arith.constant 0 : i32
    %c0_i32_1 = arith.constant 0 : i32
    %c0_i32_2 = arith.constant 0 : i32
    return %c0_i32, %c0_i32_0, %c0_i32_1 : i32, i32, i32
  }
  func.func @transform_4(%arg0: i32, %arg1: i32) -> (i32, i32, i32) {
    %c0_i32 = arith.constant 0 : i32
    %c0_i32_0 = arith.constant 0 : i32
    %c0_i32_1 = arith.constant 0 : i32
    %c0_i32_2 = arith.constant 0 : i32
    return %c0_i32, %c0_i32_0, %c0_i32_1 : i32, i32, i32
  }
  func.func @transform_5(%arg0: i32, %arg1: i32) -> (i32, i32) {
    %c0_i32 = arith.constant 0 : i32
    %c0_i32_0 = arith.constant 0 : i32
    %c0_i32_1 = arith.constant 0 : i32
    return %c0_i32, %c0_i32_0 : i32, i32
  }
  func.func @transform_6(%arg0: i32, %arg1: i32) -> (i32, i32) {
    %c0_i32 = arith.constant 0 : i32
    %c0_i32_0 = arith.constant 0 : i32
    %c0_i32_1 = arith.constant 0 : i32
    return %c0_i32, %c0_i32_0 : i32, i32
  }
  func.func @transform_7(%arg0: i32, %arg1: i32) -> (i32, i32) {
    %c0_i32 = arith.constant 0 : i32
    %c0_i32_0 = arith.constant 0 : i32
    return %arg0, %c0_i32 : i32, i32
  }
}

</mosaic_0001>

<llo_original>
// kernel: neural_network5_forward.1
$region0: #{neural_network5_forward.1}
  #allocation0 [shape = 'u32[]', space=smem, size = 0x4, offset = 0x4, fixed_abs, tag = 'smem constant byte address 0x4 - core index']
  #allocation1 [shape = 'u32[144,128]{1,0:T(1,128)}', space=vmem, size = 0x12000, scoped, tag = 'internal scratch']
  #allocation2 [shape = 'f32[8,128]{1,0:T(8,128)}', space=vmem, size = 0x1000, scoped, tag = 'scratch operand']
  #allocation3 [shape = 'f32[1,1]{1,0:T(1,128)S(1)}', space=vmem, size = 0x200, scoped, tag = 'scoped memory for neural_network5_forward.1']
  %s0 = inlined_call_operand.vmem [shape: f32[8,16], index: 0, kind: input, shape index: {}]
  %s1 = inlined_call_operand.vmem [shape: bf16[16,128], index: 1, kind: input, shape index: {}]
  %s2 = inlined_call_operand.vmem [shape: f32[1,128], index: 2, kind: input, shape index: {}]
  %s3 = inlined_call_operand.hbm [shape: bf16[4,128,128], index: 3, kind: input, shape index: {}]
  %s4 = inlined_call_operand.vmem [shape: f32[4,1,128], index: 4, kind: input, shape index: {}]
  %s5 = inlined_call_operand.vmem [shape: f32[1,128], index: 5, kind: input, shape index: {}]
  %s6 = inlined_call_operand.<no memory space> [shape: f32[1,1], index: 6, kind: input, shape index: {}]
  %s7 = inlined_call_operand.vmem [shape: f32[8,1], index: 7, kind: output, shape index: {}]
  %s8 = sld [smem:[#allocation0]]
  $region50: #{neural_network5_forward.1} parent=0
    _
  %s10 = ssub.s32 1, %s8
  %s11 = scalar_select 0, %s10, %s8
  %v12 = vstv %s6
  %13 = vst [vmem:[#allocation3] sm:$0x1] %v12
  $region1: #{neural_network5_forward.1} parent=0
    #allocation4 [shape = 'u8[131072]{0}', space=vmem, size = 0x20000, scoped, tag = 'input window, operand 3, single buffered']
    #allocation5 [shape = 's32[1]{0}', space=sflag, size = 0x4, scoped, tag = 'scoped memory for neural_network5_forward.1']
    %14 = vsyncpa [#allocation5], 0
    // Predicated region
    $region2: #{neural_network5_forward.1} parent=1 // pred_check
      _
    $region3: #{neural_network5_forward.1} parent=1 // pred_check_branch
      %16 = sbr.rel (0) target = $region5
    $region4: #{neural_network5_forward.1} parent=1 // pred_region
      _
    $region5: #{neural_network5_forward.1} parent=1 // pred_fallthru
      _
    // Predicated region
    $region6: #{neural_network5_forward.1} parent=1 // pred_check
      _
    $region7: #{neural_network5_forward.1} parent=1 // pred_check_branch
      %18 = sbr.rel (0) target = $region9
    $region8: #{neural_network5_forward.1} parent=1 // pred_region
      _
    $region9: #{neural_network5_forward.1} parent=1 // pred_fallthru
      _
    // Predicated region
    $region10: #{neural_network5_forward.1} parent=1 // pred_check
      _
    $region11: #{neural_network5_forward.1} parent=1 // pred_check_branch
      %20 = sbr.rel (0) target = $region13
    $region12: #{neural_network5_forward.1} parent=1 // pred_region
      _
    $region13: #{neural_network5_forward.1} parent=1 // pred_fallthru
      _
    // Predicated region
    $region14: #{neural_network5_forward.1} parent=1 // pred_check
      _
    $region15: #{neural_network5_forward.1} parent=1 // pred_check_branch
      %22 = sbr.rel (0) target = $region17
    $region16: #{neural_network5_forward.1} parent=1 // pred_region
      %s24 = ssub.s32 4096, 4096
      %25 = vsyncadd [#allocation5], %s24
      %s26 = sshll.u32 [#allocation4], 4
      %s27 = int_to_ptr.vmem [resolvable:$true] %s26
      %32 = dma.hbm_to_vmem [thread:$0]  %s3, 4096, %s27, [#allocation5], 64, 64, 4
    $region17: #{neural_network5_forward.1} parent=1 // pred_fallthru
      _
    // Predicated region
    $region18: #{neural_network5_forward.1} parent=1 // pred_check
      _
    $region19: #{neural_network5_forward.1} parent=1 // pred_check_branch
      %34 = sbr.rel (0) target = $region21
    $region20: #{neural_network5_forward.1} parent=1 // pred_region
      _
    $region21: #{neural_network5_forward.1} parent=1 // pred_fallthru
      _
    // Predicated region
    $region22: #{neural_network5_forward.1} parent=1 // pred_check
      _
    $region23: #{neural_network5_forward.1} parent=1 // pred_check_branch
      %36 = sbr.rel (0) target = $region25
    $region24: #{neural_network5_forward.1} parent=1 // pred_region
      _
    $region25: #{neural_network5_forward.1} parent=1 // pred_fallthru
      _
    // Predicated region
    $region26: #{neural_network5_forward.1} parent=1 // pred_check
      _
    $region27: #{neural_network5_forward.1} parent=1 // pred_check_branch
      %38 = sbr.rel (0) target = $region29
    $region28: #{neural_network5_forward.1} parent=1 // pred_region
      _
    $region29: #{neural_network5_forward.1} parent=1 // pred_fallthru
      _
    // Predicated region
    $region30: #{neural_network5_forward.1} parent=1 // pred_check
      _
    $region31: #{neural_network5_forward.1} parent=1 // pred_check_branch
      %40 = sbr.rel (0) target = $region33
    $region32: #{neural_network5_forward.1} parent=1 // pred_region
      %41 = dma.done [#allocation5], 4096
    $region33: #{neural_network5_forward.1} parent=1 // pred_fallthru
      _
    %p43 = scmp.eq.s32.totalorder 0, 0
    // Predicated region
    $region34: #{neural_network5_forward.1} parent=1 // pred_check
      %p44 = pneg %p43
    $region35: #{neural_network5_forward.1} parent=1 // pred_check_branch
      %46 = sbr.rel (%p44) target = $region37
    $region36: #{neural_network5_forward.1} parent=1 // pred_region
      %47 = vst [vmem:[#allocation2] sm:$0xff] 0.0
    $region37: #{neural_network5_forward.1} parent=1 // pred_fallthru
      _
    %v48 = vld [vmem:[#allocation2] sm:$0xff]
    %v49 = vld [vmem:[%s0] sm:$0xff]
    %v50 = vpack.c.bf16 %v49, %v49
    %v51 = vld [vmem:[%s1] sm:$0xf]
    %v52 = vld [vmem:[%s1 + $0x4] sm:$0xf]
    %v55 = vunpack.c.l.b16 %v51
    %v56 = vunpack.c.l.b16 %v52
    %v57 = vpack.c.b16 %v56, %v55
    %vm59 = vcmask 130048
    %v61 = vsel %vm59, %v50, 0
    %63 = vmatprep.subr.bf16.mxu0 0
    %64 = vmatpush1.bf16.msra.mxu0 0
    %65 = vmatprep.subr.bf16.mxu0 0
    %66 = vmatpush1.bf16.msra.mxu0 0
    %67 = vmatprep.subr.bf16.mxu0 0
    %68 = vmatpush1.bf16.msra.mxu0 0
    %69 = vmatprep.subr.bf16.mxu0 0
    %70 = vmatpush1.bf16.msra.mxu0 0
    %71 = vmatprep.subr.bf16.mxu0 0
    %72 = vmatpush1.bf16.msra.mxu0 0
    %73 = vmatprep.subr.bf16.mxu0 0
    %74 = vmatpush1.bf16.msra.mxu0 0
    %75 = vmatprep.subr.bf16.mxu0 0
    %76 = vmatpush1.bf16.msra.mxu0 0
    %77 = vmatprep.subr.bf16.mxu0 0
    %78 = vmatpush1.bf16.msra.mxu0 %v57
    %79 = vmatprep.subr.bf16.mxu0 0
    %80 = vmatpush2.bf16.msra.mxu0 0
    %81 = vmatprep.subr.bf16.mxu0 0
    %82 = vmatpush2.bf16.msra.mxu0 0
    %83 = vmatprep.subr.bf16.mxu0 0
    %84 = vmatpush2.bf16.msra.mxu0 0
    %85 = vmatprep.subr.bf16.mxu0 0
    %86 = vmatpush2.bf16.msra.mxu0 0
    %87 = vmatprep.subr.bf16.mxu0 0
    %88 = vmatpush2.bf16.msra.mxu0 0
    %89 = vmatprep.subr.bf16.mxu0 0
    %90 = vmatpush2.bf16.msra.mxu0 0
    %91 = vmatprep.subr.bf16.mxu0 0
    %92 = vmatpush2.bf16.msra.mxu0 0
    %93 = vmatprep.subr.bf16.mxu0 0
    %94 = vmatpush2.bf16.msra.mxu0 0
    %95 = vmatprep.mubr.bf16.mxu0 0
    %96 = vmatmul.mubr.bf16.gmra.mxu0 %v61
    %v97 = vpop.f32.mrf.mxu0
    %v98 = vadd.f32 0.0, %v97
    %v99 = vpop.f32.mrf.mxu0
    %v100 = vpop.f32.mrf.mxu0
    %v101 = vpop.f32.mrf.mxu0
    %102 = vdwg.mxu0
    %v103 = vadd.f32 %v48, %v98
    %104 = vst [vmem:[#allocation2] sm:$0xff] %v103
    // Predicated region
    $region38: #{neural_network5_forward.1} parent=1 // pred_check
      %p105 = pneg %p43
    $region39: #{neural_network5_forward.1} parent=1 // pred_check_branch
      %107 = sbr.rel (%p105) target = $region41
    $region40: #{neural_network5_forward.1} parent=1 // pred_region
      %v108 = vld [vmem:[#allocation2] sm:$0xff]
      %v109 = vld [vmem:[%s2] sm:$0x1]
      %v111 = vlaneseq
      %v112 = vshrl.u32 %v111, 7
      %v113 = vsub.s32 0, %v112
      %v114 = vrot.slane %v109, %v113
      %v116 = vadd.f32 %v108, %v114
      %v117 = vmax.f32 %v116, 0.0
      %v118 = vpack.c.bf16 %v117, %v117
      %v119 = vld [vmem:[#allocation4] sm:$0xf]
      %v120 = vld [vmem:[#allocation4 + $0x4] sm:$0xf]
      %v121 = vld [vmem:[#allocation4 + $0x8] sm:$0xf]
      %v122 = vld [vmem:[#allocation4 + $0xc] sm:$0xf]
      %v123 = vld [vmem:[#allocation4 + $0x10] sm:$0xf]
      %v124 = vld [vmem:[#allocation4 + $0x14] sm:$0xf]
      %v125 = vld [vmem:[#allocation4 + $0x18] sm:$0xf]
      %v126 = vld [vmem:[#allocation4 + $0x1c] sm:$0xf]
      %v127 = vld [vmem:[#allocation4 + $0x20] sm:$0xf]
      %v128 = vld [vmem:[#allocation4 + $0x24] sm:$0xf]
      %v129 = vld [vmem:[#allocation4 + $0x28] sm:$0xf]
      %v130 = vld [vmem:[#allocation4 + $0x2c] sm:$0xf]
      %v131 = vld [vmem:[#allocation4 + $0x30] sm:$0xf]
      %v132 = vld [vmem:[#allocation4 + $0x34] sm:$0xf]
      %v133 = vld [vmem:[#allocation4 + $0x38] sm:$0xf]
      %v134 = vld [vmem:[#allocation4 + $0x3c] sm:$0xf]
      %v135 = vld [vmem:[%s4] sm:$0x1]
      %v137 = vlaneseq
      %v138 = vshrl.u32 %v137, 7
      %v139 = vsub.s32 0, %v138
      %v140 = vrot.slane %v135, %v139
      %v158 = vunpack.c.l.b16 %v119
      %v159 = vunpack.c.l.b16 %v120
      %v160 = vunpack.c.l.b16 %v121
      %v161 = vunpack.c.l.b16 %v122
      %v162 = vunpack.c.l.b16 %v123
      %v163 = vunpack.c.l.b16 %v124
      %v164 = vunpack.c.l.b16 %v125
      %v165 = vunpack.c.l.b16 %v126
      %v166 = vunpack.c.l.b16 %v127
      %v167 = vunpack.c.l.b16 %v128
      %v168 = vunpack.c.l.b16 %v129
      %v169 = vunpack.c.l.b16 %v130
      %v170 = vunpack.c.l.b16 %v131
      %v171 = vunpack.c.l.b16 %v132
      %v172 = vunpack.c.l.b16 %v133
      %v173 = vunpack.c.l.b16 %v134
      %v174 = vpack.c.b16 %v159, %v158
      %v175 = vpack.c.b16 %v161, %v160
      %v176 = vpack.c.b16 %v163, %v162
      %v177 = vpack.c.b16 %v165, %v164
      %v178 = vpack.c.b16 %v167, %v166
      %v179 = vpack.c.b16 %v169, %v168
      %v180 = vpack.c.b16 %v171, %v170
      %v181 = vpack.c.b16 %v173, %v172
      %190 = vmatprep.subr.bf16.mxu0 0
      %191 = vmatpush1.bf16.msra.mxu0 %v181
      %192 = vmatprep.subr.bf16.mxu0 0
      %193 = vmatpush1.bf16.msra.mxu0 %v180
      %194 = vmatprep.subr.bf16.mxu0 0
      %195 = vmatpush1.bf16.msra.mxu0 %v179
      %196 = vmatprep.subr.bf16.mxu0 0
      %197 = vmatpush1.bf16.msra.mxu0 %v178
      %198 = vmatprep.subr.bf16.mxu0 0
      %199 = vmatpush1.bf16.msra.mxu0 %v177
      %200 = vmatprep.subr.bf16.mxu0 0
      %201 = vmatpush1.bf16.msra.mxu0 %v176
      %202 = vmatprep.subr.bf16.mxu0 0
      %203 = vmatpush1.bf16.msra.mxu0 %v175
      %204 = vmatprep.subr.bf16.mxu0 0
      %205 = vmatpush1.bf16.msra.mxu0 %v174
      %206 = vmatprep.subr.bf16.mxu0 0
      %207 = vmatpush2.bf16.msra.mxu0 0
      %208 = vmatprep.subr.bf16.mxu0 0
      %209 = vmatpush2.bf16.msra.mxu0 0
      %210 = vmatprep.subr.bf16.mxu0 0
      %211 = vmatpush2.bf16.msra.mxu0 0
      %212 = vmatprep.subr.bf16.mxu0 0
      %213 = vmatpush2.bf16.msra.mxu0 0
      %214 = vmatprep.subr.bf16.mxu0 0
      %215 = vmatpush2.bf16.msra.mxu0 0
      %216 = vmatprep.subr.bf16.mxu0 0
      %217 = vmatpush2.bf16.msra.mxu0 0
      %218 = vmatprep.subr.bf16.mxu0 0
      %219 = vmatpush2.bf16.msra.mxu0 0
      %220 = vmatprep.subr.bf16.mxu0 0
      %221 = vmatpush2.bf16.msra.mxu0 0
      %222 = vmatprep.mubr.bf16.mxu0 0
      %223 = vmatmul.mubr.bf16.gmra.mxu0 %v118
      %v224 = vpop.f32.mrf.mxu0
      %v225 = vadd.f32 %v140, %v224
      %v226 = vpop.f32.mrf.mxu0
      %v227 = vpop.f32.mrf.mxu0
      %v228 = vpop.f32.mrf.mxu0
      %229 = vdwg.mxu0
      %v230 = vmax.f32 %v225, 0.0
      %v231 = vpack.c.bf16 %v230, %v230
      %s232 = scalar_lea.vmem [#allocation4], 64
      %v233 = vld [vmem:[%s232] sm:$0xf]
      %v234 = vld [vmem:[%s232 + $0x4] sm:$0xf]
      %v235 = vld [vmem:[%s232 + $0x8] sm:$0xf]
      %v236 = vld [vmem:[%s232 + $0xc] sm:$0xf]
      %v237 = vld [vmem:[%s232 + $0x10] sm:$0xf]
      %v238 = vld [vmem:[%s232 + $0x14] sm:$0xf]
      %v239 = vld [vmem:[%s232 + $0x18] sm:$0xf]
      %v240 = vld [vmem:[%s232 + $0x1c] sm:$0xf]
      %v241 = vld [vmem:[%s232 + $0x20] sm:$0xf]
      %v242 = vld [vmem:[%s232 + $0x24] sm:$0xf]
      %v243 = vld [vmem:[%s232 + $0x28] sm:$0xf]
      %v244 = vld [vmem:[%s232 + $0x2c] sm:$0xf]
      %v245 = vld [vmem:[%s232 + $0x30] sm:$0xf]
      %v246 = vld [vmem:[%s232 + $0x34] sm:$0xf]
      %v247 = vld [vmem:[%s232 + $0x38] sm:$0xf]
      %v248 = vld [vmem:[%s232 + $0x3c] sm:$0xf]
      %s249 = scalar_lea.vmem %s4, 1
      %v250 = vld [vmem:[%s249] sm:$0x1]
      %v252 = vlaneseq
      %v253 = vshrl.u32 %v252, 7
      %v254 = vsub.s32 0, %v253
      %v255 = vrot.slane %v250, %v254
      %v273 = vunpack.c.l.b16 %v233
      %v274 = vunpack.c.l.b16 %v234
      %v275 = vunpack.c.l.b16 %v235
      %v276 = vunpack.c.l.b16 %v236
      %v277 = vunpack.c.l.b16 %v237
      %v278 = vunpack.c.l.b16 %v238
      %v279 = vunpack.c.l.b16 %v239
      %v280 = vunpack.c.l.b16 %v240
      %v281 = vunpack.c.l.b16 %v241
      %v282 = vunpack.c.l.b16 %v242
      %v283 = vunpack.c.l.b16 %v243
      %v284 = vunpack.c.l.b16 %v244
      %v285 = vunpack.c.l.b16 %v245
      %v286 = vunpack.c.l.b16 %v246
      %v287 = vunpack.c.l.b16 %v247
      %v288 = vunpack.c.l.b16 %v248
      %v289 = vpack.c.b16 %v274, %v273
      %v290 = vpack.c.b16 %v276, %v275
      %v291 = vpack.c.b16 %v278, %v277
      %v292 = vpack.c.b16 %v280, %v279
      %v293 = vpack.c.b16 %v282, %v281
      %v294 = vpack.c.b16 %v284, %v283
      %v295 = vpack.c.b16 %v286, %v285
      %v296 = vpack.c.b16 %v288, %v287
      %305 = vmatprep.subr.bf16.mxu0 0
      %306 = vmatpush1.bf16.msra.mxu0 %v296
      %307 = vmatprep.subr.bf16.mxu0 0
      %308 = vmatpush1.bf16.msra.mxu0 %v295
      %309 = vmatprep.subr.bf16.mxu0 0
      %310 = vmatpush1.bf16.msra.mxu0 %v294
      %311 = vmatprep.subr.bf16.mxu0 0
      %312 = vmatpush1.bf16.msra.mxu0 %v293
      %313 = vmatprep.subr.bf16.mxu0 0
      %314 = vmatpush1.bf16.msra.mxu0 %v292
      %315 = vmatprep.subr.bf16.mxu0 0
      %316 = vmatpush1.bf16.msra.mxu0 %v291
      %317 = vmatprep.subr.bf16.mxu0 0
      %318 = vmatpush1.bf16.msra.mxu0 %v290
      %319 = vmatprep.subr.bf16.mxu0 0
      %320 = vmatpush1.bf16.msra.mxu0 %v289
      %321 = vmatprep.subr.bf16.mxu0 0
      %322 = vmatpush2.bf16.msra.mxu0 0
      %323 = vmatprep.subr.bf16.mxu0 0
      %324 = vmatpush2.bf16.msra.mxu0 0
      %325 = vmatprep.subr.bf16.mxu0 0
      %326 = vmatpush2.bf16.msra.mxu0 0
      %327 = vmatprep.subr.bf16.mxu0 0
      %328 = vmatpush2.bf16.msra.mxu0 0
      %329 = vmatprep.subr.bf16.mxu0 0
      %330 = vmatpush2.bf16.msra.mxu0 0
      %331 = vmatprep.subr.bf16.mxu0 0
      %332 = vmatpush2.bf16.msra.mxu0 0
      %333 = vmatprep.subr.bf16.mxu0 0
      %334 = vmatpush2.bf16.msra.mxu0 0
      %335 = vmatprep.subr.bf16.mxu0 0
      %336 = vmatpush2.bf16.msra.mxu0 0
      %337 = vmatprep.mubr.bf16.mxu0 0
      %338 = vmatmul.mubr.bf16.gmra.mxu0 %v231
      %v339 = vpop.f32.mrf.mxu0
      %v340 = vadd.f32 %v255, %v339
      %v341 = vpop.f32.mrf.mxu0
      %v342 = vpop.f32.mrf.mxu0
      %v343 = vpop.f32.mrf.mxu0
      %344 = vdwg.mxu0
      %v345 = vmax.f32 %v340, 0.0
      %v346 = vpack.c.bf16 %v345, %v345
      %s347 = scalar_lea.vmem [#allocation4], 128
      %v348 = vld [vmem:[%s347] sm:$0xf]
      %v349 = vld [vmem:[%s347 + $0x4] sm:$0xf]
      %v350 = vld [vmem:[%s347 + $0x8] sm:$0xf]
      %v351 = vld [vmem:[%s347 + $0xc] sm:$0xf]
      %v352 = vld [vmem:[%s347 + $0x10] sm:$0xf]
      %v353 = vld [vmem:[%s347 + $0x14] sm:$0xf]
      %v354 = vld [vmem:[%s347 + $0x18] sm:$0xf]
      %v355 = vld [vmem:[%s347 + $0x1c] sm:$0xf]
      %v356 = vld [vmem:[%s347 + $0x20] sm:$0xf]
      %v357 = vld [vmem:[%s347 + $0x24] sm:$0xf]
      %v358 = vld [vmem:[%s347 + $0x28] sm:$0xf]
      %v359 = vld [vmem:[%s347 + $0x2c] sm:$0xf]
      %v360 = vld [vmem:[%s347 + $0x30] sm:$0xf]
      %v361 = vld [vmem:[%s347 + $0x34] sm:$0xf]
      %v362 = vld [vmem:[%s347 + $0x38] sm:$0xf]
      %v363 = vld [vmem:[%s347 + $0x3c] sm:$0xf]
      %s364 = scalar_lea.vmem %s4, 2
      %v365 = vld [vmem:[%s364] sm:$0x1]
      %v367 = vlaneseq
      %v368 = vshrl.u32 %v367, 7
      %v369 = vsub.s32 0, %v368
      %v370 = vrot.slane %v365, %v369
      %v388 = vunpack.c.l.b16 %v348
      %v389 = vunpack.c.l.b16 %v349
      %v390 = vunpack.c.l.b16 %v350
      %v391 = vunpack.c.l.b16 %v351
      %v392 = vunpack.c.l.b16 %v352
      %v393 = vunpack.c.l.b16 %v353
      %v394 = vunpack.c.l.b16 %v354
      %v395 = vunpack.c.l.b16 %v355
      %v396 = vunpack.c.l.b16 %v356
      %v397 = vunpack.c.l.b16 %v357
      %v398 = vunpack.c.l.b16 %v358
      %v399 = vunpack.c.l.b16 %v359
      %v400 = vunpack.c.l.b16 %v360
      %v401 = vunpack.c.l.b16 %v361
      %v402 = vunpack.c.l.b16 %v362
      %v403 = vunpack.c.l.b16 %v363
      %v404 = vpack.c.b16 %v389, %v388
      %v405 = vpack.c.b16 %v391, %v390
      %v406 = vpack.c.b16 %v393, %v392
      %v407 = vpack.c.b16 %v395, %v394
      %v408 = vpack.c.b16 %v397, %v396
      %v409 = vpack.c.b16 %v399, %v398
      %v410 = vpack.c.b16 %v401, %v400
      %v411 = vpack.c.b16 %v403, %v402
      %420 = vmatprep.subr.bf16.mxu0 0
      %421 = vmatpush1.bf16.msra.mxu0 %v411
      %422 = vmatprep.subr.bf16.mxu0 0
      %423 = vmatpush1.bf16.msra.mxu0 %v410
      %424 = vmatprep.subr.bf16.mxu0 0
      %425 = vmatpush1.bf16.msra.mxu0 %v409
      %426 = vmatprep.subr.bf16.mxu0 0
      %427 = vmatpush1.bf16.msra.mxu0 %v408
      %428 = vmatprep.subr.bf16.mxu0 0
      %429 = vmatpush1.bf16.msra.mxu0 %v407
      %430 = vmatprep.subr.bf16.mxu0 0
      %431 = vmatpush1.bf16.msra.mxu0 %v406
      %432 = vmatprep.subr.bf16.mxu0 0
      %433 = vmatpush1.bf16.msra.mxu0 %v405
      %434 = vmatprep.subr.bf16.mxu0 0
      %435 = vmatpush1.bf16.msra.mxu0 %v404
      %436 = vmatprep.subr.bf16.mxu0 0
      %437 = vmatpush2.bf16.msra.mxu0 0
      %438 = vmatprep.subr.bf16.mxu0 0
      %439 = vmatpush2.bf16.msra.mxu0 0
      %440 = vmatprep.subr.bf16.mxu0 0
      %441 = vmatpush2.bf16.msra.mxu0 0
      %442 = vmatprep.subr.bf16.mxu0 0
      %443 = vmatpush2.bf16.msra.mxu0 0
      %444 = vmatprep.subr.bf16.mxu0 0
      %445 = vmatpush2.bf16.msra.mxu0 0
      %446 = vmatprep.subr.bf16.mxu0 0
      %447 = vmatpush2.bf16.msra.mxu0 0
      %448 = vmatprep.subr.bf16.mxu0 0
      %449 = vmatpush2.bf16.msra.mxu0 0
      %450 = vmatprep.subr.bf16.mxu0 0
      %451 = vmatpush2.bf16.msra.mxu0 0
      %452 = vmatprep.mubr.bf16.mxu0 0
      %453 = vmatmul.mubr.bf16.gmra.mxu0 %v346
      %v454 = vpop.f32.mrf.mxu0
      %v455 = vadd.f32 %v370, %v454
      %v456 = vpop.f32.mrf.mxu0
      %v457 = vpop.f32.mrf.mxu0
      %v458 = vpop.f32.mrf.mxu0
      %459 = vdwg.mxu0
      %v460 = vmax.f32 %v455, 0.0
      %v461 = vpack.c.bf16 %v460, %v460
      %s462 = scalar_lea.vmem [#allocation4], 192
      %v463 = vld [vmem:[%s462] sm:$0xf]
      %v464 = vld [vmem:[%s462 + $0x4] sm:$0xf]
      %v465 = vld [vmem:[%s462 + $0x8] sm:$0xf]
      %v466 = vld [vmem:[%s462 + $0xc] sm:$0xf]
      %v467 = vld [vmem:[%s462 + $0x10] sm:$0xf]
      %v468 = vld [vmem:[%s462 + $0x14] sm:$0xf]
      %v469 = vld [vmem:[%s462 + $0x18] sm:$0xf]
      %v470 = vld [vmem:[%s462 + $0x1c] sm:$0xf]
      %v471 = vld [vmem:[%s462 + $0x20] sm:$0xf]
      %v472 = vld [vmem:[%s462 + $0x24] sm:$0xf]
      %v473 = vld [vmem:[%s462 + $0x28] sm:$0xf]
      %v474 = vld [vmem:[%s462 + $0x2c] sm:$0xf]
      %v475 = vld [vmem:[%s462 + $0x30] sm:$0xf]
      %v476 = vld [vmem:[%s462 + $0x34] sm:$0xf]
      %v477 = vld [vmem:[%s462 + $0x38] sm:$0xf]
      %v478 = vld [vmem:[%s462 + $0x3c] sm:$0xf]
      %s479 = scalar_lea.vmem %s4, 3
      %v480 = vld [vmem:[%s479] sm:$0x1]
      %v482 = vlaneseq
      %v483 = vshrl.u32 %v482, 7
      %v484 = vsub.s32 0, %v483
      %v485 = vrot.slane %v480, %v484
      %v503 = vunpack.c.l.b16 %v463
      %v504 = vunpack.c.l.b16 %v464
      %v505 = vunpack.c.l.b16 %v465
      %v506 = vunpack.c.l.b16 %v466
      %v507 = vunpack.c.l.b16 %v467
      %v508 = vunpack.c.l.b16 %v468
      %v509 = vunpack.c.l.b16 %v469
      %v510 = vunpack.c.l.b16 %v470
      %v511 = vunpack.c.l.b16 %v471
      %v512 = vunpack.c.l.b16 %v472
      %v513 = vunpack.c.l.b16 %v473
      %v514 = vunpack.c.l.b16 %v474
      %v515 = vunpack.c.l.b16 %v475
      %v516 = vunpack.c.l.b16 %v476
      %v517 = vunpack.c.l.b16 %v477
      %v518 = vunpack.c.l.b16 %v478
      %v519 = vpack.c.b16 %v504, %v503
      %v520 = vpack.c.b16 %v506, %v505
      %v521 = vpack.c.b16 %v508, %v507
      %v522 = vpack.c.b16 %v510, %v509
      %v523 = vpack.c.b16 %v512, %v511
      %v524 = vpack.c.b16 %v514, %v513
      %v525 = vpack.c.b16 %v516, %v515
      %v526 = vpack.c.b16 %v518, %v517
      %535 = vmatprep.subr.bf16.mxu0 0
      %536 = vmatpush1.bf16.msra.mxu0 %v526
      %537 = vmatprep.subr.bf16.mxu0 0
      %538 = vmatpush1.bf16.msra.mxu0 %v525
      %539 = vmatprep.subr.bf16.mxu0 0
      %540 = vmatpush1.bf16.msra.mxu0 %v524
      %541 = vmatprep.subr.bf16.mxu0 0
      %542 = vmatpush1.bf16.msra.mxu0 %v523
      %543 = vmatprep.subr.bf16.mxu0 0
      %544 = vmatpush1.bf16.msra.mxu0 %v522
      %545 = vmatprep.subr.bf16.mxu0 0
      %546 = vmatpush1.bf16.msra.mxu0 %v521
      %547 = vmatprep.subr.bf16.mxu0 0
      %548 = vmatpush1.bf16.msra.mxu0 %v520
      %549 = vmatprep.subr.bf16.mxu0 0
      %550 = vmatpush1.bf16.msra.mxu0 %v519
      %551 = vmatprep.subr.bf16.mxu0 0
      %552 = vmatpush2.bf16.msra.mxu0 0
      %553 = vmatprep.subr.bf16.mxu0 0
      %554 = vmatpush2.bf16.msra.mxu0 0
      %555 = vmatprep.subr.bf16.mxu0 0
      %556 = vmatpush2.bf16.msra.mxu0 0
      %557 = vmatprep.subr.bf16.mxu0 0
      %558 = vmatpush2.bf16.msra.mxu0 0
      %559 = vmatprep.subr.bf16.mxu0 0
      %560 = vmatpush2.bf16.msra.mxu0 0
      %561 = vmatprep.subr.bf16.mxu0 0
      %562 = vmatpush2.bf16.msra.mxu0 0
      %563 = vmatprep.subr.bf16.mxu0 0
      %564 = vmatpush2.bf16.msra.mxu0 0
      %565 = vmatprep.subr.bf16.mxu0 0
      %566 = vmatpush2.bf16.msra.mxu0 0
      %567 = vmatprep.mubr.bf16.mxu0 0
      %568 = vmatmul.mubr.bf16.gmra.mxu0 %v461
      %v569 = vpop.f32.mrf.mxu0
      %v570 = vadd.f32 %v485, %v569
      %v571 = vpop.f32.mrf.mxu0
      %v572 = vpop.f32.mrf.mxu0
      %v573 = vpop.f32.mrf.mxu0
      %574 = vdwg.mxu0
      %v575 = vmax.f32 %v570, 0.0
      %v576 = vld [vmem:[%s5] sm:$0x1]
      %v578 = vlaneseq
      %v579 = vshrl.u32 %v578, 7
      %v580 = vsub.s32 0, %v579
      %v581 = vrot.slane %v576, %v580
      %v583 = vmul.f32 %v575, %v581
      %584 = vadd.xlane.f32.xlu0 %v583
      %v585 = vpop.xlane.xlu0 %584
      %v586 = vld [vmem:[#allocation3] sm:$0x1]
      %v588 = vlaneseq
      %v589 = vshrl.u32 %v588, 7
      %v590 = vsub.s32 0, %v589
      %v591 = vrot.slane %v586, %v590
      %v593 = vadd.f32 %v585, %v591
      %vm594 = vcmask 7168
      %595 = vst.msk [vmem:[%s7] sm:$0xff] %vm594, %v593
    $region41: #{neural_network5_forward.1} parent=1 // pred_fallthru
      _
    // Predicated region
    $region42: #{neural_network5_forward.1} parent=1 // pred_check
      _
    $region43: #{neural_network5_forward.1} parent=1 // pred_check_branch
      %597 = sbr.rel (0) target = $region45
    $region44: #{neural_network5_forward.1} parent=1 // pred_region
      _
    $region45: #{neural_network5_forward.1} parent=1 // pred_fallthru
      _
    // Predicated region
    $region46: #{neural_network5_forward.1} parent=1 // pred_check
      _
    $region47: #{neural_network5_forward.1} parent=1 // pred_check_branch
      %599 = sbr.rel (0) target = $region49
    $region48: #{neural_network5_forward.1} parent=1 // pred_region
      _
    $region49: #{neural_network5_forward.1} parent=1 // pred_fallthru
      _
    %600 = vsyncpa [#allocation5], 1

</llo_original>
